<compile_context>
chip_gen: v6e
topology: v6e:2x2x1
jax: 0.10.0
libtpu: 0.0.40
codegen_flags: <defaults>
</compile_context>

<pallas_src>
import math
from functools import partial

import jax
import jax.numpy as jnp
from jax.experimental import pallas as pl
from jax.experimental.pallas import tpu as pltpu


def _exp_term_kernel(params_ref, x_ref, o_ref, *, compute_dtype):
    # params_ref: SMEM f32[2] -> [factor, log1p(|base|)]
    factor = params_ref[0].astype(compute_dtype)
    log_b = params_ref[1].astype(compute_dtype)
    x = x_ref[...].astype(compute_dtype)
    # factor * exp(X * log(1 + |base|))  ==  factor * (1 + |base|) ** X
    o_ref[...] = (factor * jnp.exp(x * log_b)).astype(o_ref.dtype)


def _exp_term_jnp(x, factor_f32, log_b_f32, compute_dtype, out_dtype):
    xc = x.astype(compute_dtype)
    y = factor_f32.astype(compute_dtype) * jnp.exp(xc * log_b_f32.astype(compute_dtype))
    return y.astype(out_dtype)


def _round_up(v, m):
    return -(-v // m) * m


def _exp_term_pallas_flat(flat, factor_f32, log_b_f32, compute_dtype):
    """Runs the Pallas kernel on a flat vector whose length is a multiple of 128."""
    out_dtype = flat.dtype
    n = flat.shape[0]

    # Widest lane-dense view dividing n (n is a multiple of 128) -> unmasked vst.
    lane = 128
    for cand in (1024, 512, 256):
        if n % cand == 0:
            lane = cand
            break
    rows = n // lane
    x2 = flat.reshape(rows, lane)

    itemsize = flat.dtype.itemsize
    sublane = {1: 32, 2: 16}.get(itemsize, 8)     # dtype packing multiple
    target_block_bytes = 2 << 20                  # ~2 MiB blocks: >=85% HBM roofline;
                                                  # in+out double-buffered ~8 MiB VMEM
                                                  # (fits v5e 16 MiB scoped, v7x 64 MiB phys)
    max_rows = max(sublane,
                   (target_block_bytes // (lane * itemsize)) // sublane * sublane)

    if rows <= max_rows:
        if rows > 64:
            # Split into 2 "parallel" grid steps so both v7x TensorCores get work.
            tile_rows = _round_up(pl.cdiv(rows, 2), sublane)
        else:
            tile_rows = rows          # whole array in a single step
    else:
        # Prefer a tile_rows that divides rows (avoids a nearly-empty masked tail
        # step with vst.msk partial stores), but never drop below ~1 MiB blocks.
        tile_rows = max_rows
        for cand in range(max_rows, max(sublane, max_rows // 2) - 1, -sublane):
            if rows % cand == 0:
                tile_rows = cand
                break

    grid = (pl.cdiv(rows, tile_rows),)

    # Scalars live in SMEM; the scalar transcendental was hoisted to the wrapper.
    params = jnp.stack([factor_f32, log_b_f32])

    cost = pl.CostEstimate(
        flops=2 * n,
        transcendentals=n,
        bytes_accessed=2 * n * itemsize + 8,
    )

    out2 = pl.pallas_call(
        partial(_exp_term_kernel, compute_dtype=compute_dtype),
        out_shape=jax.ShapeDtypeStruct((rows, lane), out_dtype),
        grid=grid,
        in_specs=[
            pl.BlockSpec(memory_space=pltpu.SMEM),               # [factor, log1p(|base|)]
            pl.BlockSpec((tile_rows, lane), lambda i: (i, 0)),   # x tile
        ],
        out_specs=pl.BlockSpec((tile_rows, lane), lambda i: (i, 0)),
        compiler_params=pltpu.CompilerParams(
            dimension_semantics=("parallel",)),
        cost_estimate=cost,
    )(params, x2)
    return out2.reshape(-1)


def exponential_term_forward(x: jax.Array, factor: jax.Array, base: jax.Array) -> jax.Array:
    """factor * (1 + |base|) ** x  (composed is None => compose_forward is identity)."""
    orig_shape = x.shape
    dtype = x.dtype
    n = math.prod(orig_shape) if orig_shape else 1

    # Hoist scalar transcendental: computed once, outside the grid.
    factor_f32 = factor.reshape(()).astype(jnp.float32)
    log_b_f32 = jnp.log1p(jnp.abs(base.reshape(()))).astype(jnp.float32)

    # bf16/f16 compute natively (halves vreg pressure + EUP pushes on v6e/v7x;
    # Mosaic upcasts internally on v5e).  Everything else computes in f32.
    if dtype == jnp.bfloat16 or dtype == jnp.float16:
        compute_dtype = dtype
    else:
        compute_dtype = jnp.float32

    flat = x.reshape(-1)

    if n < 128:
        # Tiny tensors: a kernel launch buys nothing; pure jnp.
        out = _exp_term_jnp(flat, factor_f32, log_b_f32, compute_dtype, dtype)
        return out.reshape(orig_shape)

    # Kernel on the largest 128-divisible prefix; ragged (<128 element) tail in
    # plain jnp.  No full-tensor pad/copy (kernel is 100% HBM-bandwidth bound).
    n_main = (n // 128) * 128
    if n_main == n:
        out = _exp_term_pallas_flat(flat, factor_f32, log_b_f32, compute_dtype)
    else:
        main_out = _exp_term_pallas_flat(flat[:n_main], factor_f32, log_b_f32, compute_dtype)
        tail_out = _exp_term_jnp(flat[n_main:], factor_f32, log_b_f32, compute_dtype, dtype)
        out = jnp.concatenate([main_out, tail_out])
    return out.reshape(orig_shape)


if __name__ == "__main__":
    key = jax.random.PRNGKey(0)
    k_x, k_f, k_b, k_x2 = jax.random.split(key, 4)

    # deterministic "torch.randn((1,))"-style parameter init
    factor = jax.random.normal(k_f, (1,), dtype=jnp.float32)
    base = jax.random.normal(k_b, (1,), dtype=jnp.float32)

    # small NCHW-like input consistent with a generic tensor forward
    x = jax.random.normal(k_x, (2, 4, 16, 16), dtype=jnp.float32)

    y = exponential_term_forward(x, factor, base)
    y = jax.block_until_ready(y)

    # pure-JAX reference check
    ref = factor[0] * jnp.power(1.0 + jnp.abs(base[0]), x)
    assert y.shape == x.shape and y.dtype == x.dtype
    assert jnp.allclose(y, ref, rtol=1e-5, atol=1e-5), "mismatch vs reference (f32)"

    # ragged-size path (128-divisible prefix via kernel + jnp tail)
    x_odd = jax.random.normal(k_x2, (2053,), dtype=jnp.float32)
    y_odd = jax.block_until_ready(exponential_term_forward(x_odd, factor, base))
    ref_odd = factor[0] * jnp.power(1.0 + jnp.abs(base[0]), x_odd)
    assert jnp.allclose(y_odd, ref_odd, rtol=1e-5, atol=1e-5), "mismatch vs reference (ragged)"

    print("KERNEL_OK")
</pallas_src>

<mosaic_0001>
module attributes {stable_mosaic.version = 11 : i64} {
  func.func @_exp_term_kernel(%arg0: i32, %arg1: memref<2xf32, #tpu.memory_space<smem>>, %arg2: memref<2x1024xf32, #tpu.memory_space<vmem>>, %arg3: memref<2x1024xf32, #tpu.memory_space<vmem>>) attributes {dimension_semantics = [#tpu.dimension_semantics<parallel>], iteration_bounds = array<i64: 1>, scalar_prefetch = 0 : i64, scratch_operands = 0 : i64, tpu.core_type = #tpu.core_type<tc>, window_params = [{transform_indices = @transform_0, window_bounds = array<i64: 2>}, {transform_indices = @transform_1, window_bounds = array<i64: 2, 1024>}, {transform_indices = @transform_2, window_bounds = array<i64: 2, 1024>}]} {
    %c0 = arith.constant 0 : index
    %0 = memref.load %arg1[%c0] : memref<2xf32, #tpu.memory_space<smem>>
    %c1 = arith.constant 1 : index
    %1 = memref.load %arg1[%c1] : memref<2xf32, #tpu.memory_space<smem>>
    %c0_0 = arith.constant 0 : index
    %c0_1 = arith.constant 0 : index
    %2 = vector.load %arg2[%c0_0, %c0_1] : memref<2x1024xf32, #tpu.memory_space<vmem>>, vector<2x1024xf32>
    %3 = vector.broadcast %1 : f32 to vector<2x1024xf32>
    %4 = arith.mulf %2, %3 : vector<2x1024xf32>
    %5 = math.exp %4 : vector<2x1024xf32>
    %6 = vector.broadcast %0 : f32 to vector<2x1024xf32>
    %7 = arith.mulf %6, %5 : vector<2x1024xf32>
    %c0_2 = arith.constant 0 : index
    %c0_3 = arith.constant 0 : index
    %8 = vector.load %arg3[%c0_2, %c0_3] : memref<2x1024xf32, #tpu.memory_space<vmem>>, vector<2x1024xf32>
    tpu.vector_store %arg3[%c0_2, %c0_3], %7 {strides = array<i32>} : memref<2x1024xf32, #tpu.memory_space<vmem>>, vector<2x1024xf32>,
    return
  }
  func.func @transform_0(%arg0: i32) -> i32 {
    %c0_i32 = arith.constant 0 : i32
    %c0_i32_0 = arith.constant 0 : i32
    return %c0_i32 : i32
  }
  func.func @transform_1(%arg0: i32) -> (i32, i32) {
    %c0_i32 = arith.constant 0 : i32
    %c0_i32_0 = arith.constant 0 : i32
    return %arg0, %c0_i32 : i32, i32
  }
  func.func @transform_2(%arg0: i32) -> (i32, i32) {
    %c0_i32 = arith.constant 0 : i32
    %c0_i32_0 = arith.constant 0 : i32
    return %arg0, %c0_i32 : i32, i32
  }
}

</mosaic_0001>

<llo_original>
// kernel: tpu_custom_call.1
$region0: #{tpu_custom_call.1}
  #allocation0 [shape = 'u32[]', space=smem, size = 0x4, offset = 0x4, fixed_abs, tag = 'smem constant byte address 0x4 - core index']
  #allocation1 [shape = 'u32[144,128]{1,0:T(1,128)}', space=vmem, size = 0x12000, scoped, tag = 'internal scratch']
  %s0 = inlined_call_operand.hbm [shape: f32[2], index: 0, kind: input, shape index: {}]
  %s1 = inlined_call_operand.hbm [shape: f32[2,1024], index: 1, kind: input, shape index: {}]
  %s2 = inlined_call_operand.hbm [shape: f32[2,1024], index: 2, kind: output, shape index: {}]
  %s3 = sld [smem:[#allocation0]]
  $region26: #{tpu_custom_call.1} parent=0
    _
  %s5 = ssub.s32 1, %s3
  %s6 = scalar_select 0, %s5, %s3
  $region1: #{tpu_custom_call.1} parent=0
    #allocation2 [shape = 'u8[512]{0}', space=smem, size = 0x200, scoped, tag = 'input window, operand 0, single buffered']
    #allocation3 [shape = 's32[1]{0}', space=sflag, size = 0x4, scoped, tag = 'scoped memory for tpu_custom_call.1']
    #allocation4 [shape = 's32[1]{0}', space=sflag, size = 0x4, scoped, tag = 'scoped memory for tpu_custom_call.1']
    #allocation5 [shape = 's32[1]{0}', space=sflag, size = 0x4, scoped, tag = 'scoped memory for tpu_custom_call.1']
    #allocation6 [shape = 'u8[8192]{0}', space=vmem, size = 0x2000, scoped, tag = 'input window, operand 1, single buffered']
    #allocation7 [shape = 'u8[8192]{0}', space=vmem, size = 0x2000, scoped, tag = 'output window, operand 0, single buffered']
    %7 = vsyncpa [#allocation5], 0
    %8 = vsyncpa [#allocation3], 0
    %9 = vsyncpa [#allocation4], 0
    // Predicated region
    $region2: #{tpu_custom_call.1} parent=1 // pred_check
      _
    $region3: #{tpu_custom_call.1} parent=1 // pred_check_branch
      %11 = sbr.rel (0) target = $region5
    $region4: #{tpu_custom_call.1} parent=1 // pred_region
      %s13 = ssub.s32 16, 16
      %14 = vsyncadd [#allocation5], %s13
      %17 = dma.hbm_to_smem %s0, 16, [#allocation2], [#allocation5]
    $region5: #{tpu_custom_call.1} parent=1 // pred_fallthru
      _
    // Predicated region
    $region6: #{tpu_custom_call.1} parent=1 // pred_check
      _
    $region7: #{tpu_custom_call.1} parent=1 // pred_check_branch
      %19 = sbr.rel (0) target = $region9
    $region8: #{tpu_custom_call.1} parent=1 // pred_region
      %s21 = ssub.s32 256, 256
      %22 = vsyncadd [#allocation3], %s21
      %s24 = sshll.u32 [#allocation6], 4
      %s25 = int_to_ptr.vmem [resolvable:$true] %s24
      %27 = dma.hbm_to_vmem [thread:$0]  %s1, 256, %s25, [#allocation3]
    $region9: #{tpu_custom_call.1} parent=1 // pred_fallthru
      _
    // Predicated region
    $region10: #{tpu_custom_call.1} parent=1 // pred_check
      _
    $region11: #{tpu_custom_call.1} parent=1 // pred_check_branch
      %29 = sbr.rel (0) target = $region13
    $region12: #{tpu_custom_call.1} parent=1 // pred_region
      %30 = dma.done [#allocation5], 16
    $region13: #{tpu_custom_call.1} parent=1 // pred_fallthru
      _
    // Predicated region
    $region14: #{tpu_custom_call.1} parent=1 // pred_check
      _
    $region15: #{tpu_custom_call.1} parent=1 // pred_check_branch
      %32 = sbr.rel (0) target = $region17
    $region16: #{tpu_custom_call.1} parent=1 // pred_region
      %33 = dma.done [#allocation3], 256
    $region17: #{tpu_custom_call.1} parent=1 // pred_fallthru
      _
    %34 = sfence
    %s35 = sld [smem:[#allocation2]]
    %s36 = sld [smem:[#allocation2 + $0x1]]
    %v37 = vld [vmem:[#allocation6] sm:$0xff]
    %v38 = vld [vmem:[#allocation6 + $0x8] sm:$0xff]
    %v39 = vstv %s36
    %v40 = vmul.f32 %v37, %v39
    %v41 = vmul.f32 %v38, %v39
    %v42 = vmul.f32 %v40, 1.442695
    %v43 = vpow.pop %v42
    %v44 = vmul.f32 %v41, 1.442695
    %v45 = vpow.pop %v44
    %v46 = vstv %s35
    %v47 = vmul.f32 %v46, %v43
    %v48 = vmul.f32 %v46, %v45
    %49 = vst [vmem:[#allocation7] sm:$0xff] %v47
    %50 = vst [vmem:[#allocation7 + $0x8] sm:$0xff] %v48
    // Predicated region
    $region18: #{tpu_custom_call.1} parent=1 // pred_check
      _
    $region19: #{tpu_custom_call.1} parent=1 // pred_check_branch
      %52 = sbr.rel (0) target = $region21
    $region20: #{tpu_custom_call.1} parent=1 // pred_region
      %s54 = ssub.s32 256, 256
      %55 = vsyncadd [#allocation4], %s54
      %s57 = sshll.u32 [#allocation7], 4
      %s58 = int_to_ptr.vmem [resolvable:$true] %s57
      %60 = dma.vmem_to_hbm [thread:$0]  %s58, 256, %s2, [#allocation4]
    $region21: #{tpu_custom_call.1} parent=1 // pred_fallthru
      _
    // Predicated region
    $region22: #{tpu_custom_call.1} parent=1 // pred_check
      _
    $region23: #{tpu_custom_call.1} parent=1 // pred_check_branch
      %62 = sbr.rel (0) target = $region25
    $region24: #{tpu_custom_call.1} parent=1 // pred_region
      %63 = dma.done [#allocation4], 256
    $region25: #{tpu_custom_call.1} parent=1 // pred_fallthru
      _
    %64 = vsyncpa [#allocation3], 1
    %65 = vsyncpa [#allocation4], 1
    %66 = vsyncpa [#allocation5], 1

</llo_original>
